<compile_context>
chip_gen: v6e
topology: v6e:2x2x1
jax: 0.10.0
libtpu: 0.0.40
codegen_flags: <defaults>
</compile_context>

<pallas_src>
import functools

import jax
import jax.numpy as jnp
from jax.experimental import pallas as pl
from jax.experimental.pallas import tpu as pltpu


def _round_up(n: int, m: int) -> int:
    return ((n + m - 1) // m) * m


def _mlp_kernel(x_ref, w1_ref, b1_ref, w2_ref, b2_ref, w3d_ref, b3d_ref, o_ref):
    # Feature-major layout: x_ref is (12, TB), batch on the 128-lane axis.
    x = x_ref[...]                                                    # (12, TB)

    # Linear1 + Sigmoid : (12,12) @ (12,TB) + (12,1)
    h1 = jax.nn.sigmoid(
        jnp.dot(w1_ref[...], x, preferred_element_type=jnp.float32) + b1_ref[...])

    # Linear2 + Sigmoid : (8,12) @ (12,TB) + (8,1)
    h2 = jax.nn.sigmoid(
        jnp.dot(w2_ref[...], h1, preferred_element_type=jnp.float32) + b2_ref[...])

    # Linear3 + Softmax(dim=1) over 2 classes, computed exactly as a sigmoid of
    # the logit difference: softmax([l0,l1]) == [1-sigmoid(l1-l0), sigmoid(l1-l0)]
    d = jnp.dot(w3d_ref[...], h2, preferred_element_type=jnp.float32) + b3d_ref[...]
    p1 = jax.nn.sigmoid(d)                                            # (1, TB)
    o_ref[...] = jnp.concatenate([1.0 - p1, p1], axis=0)              # (2, TB)


@functools.partial(jax.jit, static_argnames=("tb",))
def titanic_mlp_forward(x, params, tb: int = 1024):
    """x: (B, 12) float32. params: torch-layout weights (out, in), biases (out, 1)."""
    B, F = x.shape
    assert F == 12

    # Lane-aligned batch tile; pad B so every grid step is a full block.
    TB = min(tb, _round_up(B, 128))
    B_pad = _round_up(B, TB)

    # Feature-major input: (12, B_pad), zero-padded columns are sliced off below.
    xT = jnp.pad(x.astype(jnp.float32).T, ((0, 0), (0, B_pad - B)))

    w1, b1 = params["w1"], params["b1"]          # (12,12), (12,1)
    w2, b2 = params["w2"], params["b2"]          # (8,12),  (8,1)
    w3, b3 = params["w3"], params["b3"]          # (2,8),   (2,1)
    w3d = w3[1:2, :] - w3[0:1, :]                # (1, 8)  logit-difference weights
    b3d = b3[1:2, :] - b3[0:1, :]                # (1, 1)

    def full(shape):
        return pl.BlockSpec(shape, lambda i: (0, 0))

    out = pl.pallas_call(
        _mlp_kernel,
        out_shape=jax.ShapeDtypeStruct((2, B_pad), jnp.float32),
        grid=(B_pad // TB,),
        in_specs=[
            pl.BlockSpec((12, TB), lambda i: (0, i)),   # x tile, pipelined
            full((12, 12)), full((12, 1)),              # layer 1 (resident)
            full((8, 12)), full((8, 1)),                # layer 2 (resident)
            full((1, 8)), full((1, 1)),                 # layer 3 diff (resident)
        ],
        out_specs=pl.BlockSpec((2, TB), lambda i: (0, i)),
        compiler_params=pltpu.CompilerParams(
            dimension_semantics=("parallel",)),
    )(xT, w1, b1, w2, b2, w3d, b3d)

    return out[:, :B].T                                  # (B, 2)


def init_params(key):
    """Deterministic synthetic parameters matching nn.Linear shapes.
    Stored in PyTorch layout: W is (out, in); biases kept as (out, 1)."""
    k1, k2, k3, k4, k5, k6 = jax.random.split(key, 6)

    def unif(k, shape, fan_in):
        bound = 1.0 / jnp.sqrt(fan_in)
        return jax.random.uniform(k, shape, jnp.float32, -bound, bound)

    return {
        "w1": unif(k1, (12, 12), 12.0),
        "b1": unif(k2, (12, 1), 12.0),
        "w2": unif(k3, (8, 12), 12.0),
        "b2": unif(k4, (8, 1), 12.0),
        "w3": unif(k5, (2, 8), 8.0),
        "b3": unif(k6, (2, 1), 8.0),
    }


def _reference(x, p):
    h1 = jax.nn.sigmoid(x @ p["w1"].T + p["b1"].T)
    h2 = jax.nn.sigmoid(h1 @ p["w2"].T + p["b2"].T)
    return jax.nn.softmax(h2 @ p["w3"].T + p["b3"].T, axis=1)


if __name__ == "__main__":
    key = jax.random.PRNGKey(0)
    kx, kp = jax.random.split(key)
    B = 8
    x = jax.random.normal(kx, (B, 12), dtype=jnp.float32)
    params = init_params(kp)

    out = titanic_mlp_forward(x, params)
    out = jax.block_until_ready(out)

    ref = _reference(x, params)
    assert out.shape == (B, 2)
    assert jnp.allclose(out, ref, atol=1e-5, rtol=1e-5)
    assert jnp.allclose(jnp.sum(out, axis=1), 1.0, atol=1e-5)

    print("KERNEL_OK")
</pallas_src>

<mosaic_0001>
module attributes {stable_mosaic.version = 11 : i64} {
  func.func @_mlp_kernel(%arg0: i32, %arg1: memref<12x128xf32, #tpu.memory_space<vmem>>, %arg2: memref<12x12xf32, #tpu.memory_space<vmem>>, %arg3: memref<12x1xf32, #tpu.memory_space<vmem>>, %arg4: memref<8x12xf32, #tpu.memory_space<vmem>>, %arg5: memref<8x1xf32, #tpu.memory_space<vmem>>, %arg6: memref<1x8xf32, #tpu.memory_space<vmem>>, %arg7: memref<1x1xf32, #tpu.memory_space<vmem>>, %arg8: memref<2x128xf32, #tpu.memory_space<vmem>>) attributes {dimension_semantics = [#tpu.dimension_semantics<parallel>], iteration_bounds = array<i64: 1>, scalar_prefetch = 0 : i64, scratch_operands = 0 : i64, tpu.core_type = #tpu.core_type<tc>, window_params = [{transform_indices = @transform_0, window_bounds = array<i64: 12, 128>}, {pipeline_mode = #tpu.pipeline_mode<synchronous>, transform_indices = @transform_1, window_bounds = array<i64: 12, 12>}, {pipeline_mode = #tpu.pipeline_mode<synchronous>, transform_indices = @transform_2, window_bounds = array<i64: 12, 1>}, {pipeline_mode = #tpu.pipeline_mode<synchronous>, transform_indices = @transform_3, window_bounds = array<i64: 8, 12>}, {pipeline_mode = #tpu.pipeline_mode<synchronous>, transform_indices = @transform_4, window_bounds = array<i64: 8, 1>}, {pipeline_mode = #tpu.pipeline_mode<synchronous>, transform_indices = @transform_5, window_bounds = array<i64: 1, 8>}, {pipeline_mode = #tpu.pipeline_mode<synchronous>, transform_indices = @transform_6, window_bounds = array<i64: 1, 1>}, {transform_indices = @transform_7, window_bounds = array<i64: 2, 128>}]} {
    %c0 = arith.constant 0 : index
    %c0_0 = arith.constant 0 : index
    %0 = vector.load %arg1[%c0, %c0_0] : memref<12x128xf32, #tpu.memory_space<vmem>>, vector<12x128xf32>
    %c0_1 = arith.constant 0 : index
    %c0_2 = arith.constant 0 : index
    %1 = vector.load %arg2[%c0_1, %c0_2] : memref<12x12xf32, #tpu.memory_space<vmem>>, vector<12x12xf32>
    %cst = arith.constant dense<0.000000e+00> : vector<12x128xf32>
    %2 = tpu.matmul %1, %0, %cst {dimension_numbers = #tpu.dot_dimension_numbers<[1], [0], [0], [1], [0, 0, 1, 1], [], []>} : vector<12x12xf32>, vector<12x128xf32>, vector<12x128xf32> -> vector<12x128xf32>
    %c0_3 = arith.constant 0 : index
    %c0_4 = arith.constant 0 : index
    %3 = vector.load %arg3[%c0_3, %c0_4] : memref<12x1xf32, #tpu.memory_space<vmem>>, vector<12x1xf32>
    %4 = vector.broadcast %3 : vector<12x1xf32> to vector<12x128xf32>
    %5 = arith.addf %2, %4 : vector<12x128xf32>
    %6 = arith.negf %5 : vector<12x128xf32>
    %7 = math.exp %6 : vector<12x128xf32>
    %cst_5 = arith.constant 1.000000e+00 : f32
    %8 = vector.broadcast %cst_5 : f32 to vector<12x128xf32>
    %9 = arith.addf %8, %7 : vector<12x128xf32>
    %10 = arith.divf %8, %9 : vector<12x128xf32>
    %c0_6 = arith.constant 0 : index
    %c0_7 = arith.constant 0 : index
    %11 = vector.load %arg4[%c0_6, %c0_7] : memref<8x12xf32, #tpu.memory_space<vmem>>, vector<8x12xf32>
    %cst_8 = arith.constant dense<0.000000e+00> : vector<8x128xf32>
    %12 = tpu.matmul %11, %10, %cst_8 {dimension_numbers = #tpu.dot_dimension_numbers<[1], [0], [0], [1], [0, 0, 1, 1], [], []>} : vector<8x12xf32>, vector<12x128xf32>, vector<8x128xf32> -> vector<8x128xf32>
    %c0_9 = arith.constant 0 : index
    %c0_10 = arith.constant 0 : index
    %13 = vector.load %arg5[%c0_9, %c0_10] : memref<8x1xf32, #tpu.memory_space<vmem>>, vector<8x1xf32>
    %14 = vector.broadcast %13 : vector<8x1xf32> to vector<8x128xf32>
    %15 = arith.addf %12, %14 : vector<8x128xf32>
    %16 = arith.negf %15 : vector<8x128xf32>
    %17 = math.exp %16 : vector<8x128xf32>
    %cst_11 = arith.constant 1.000000e+00 : f32
    %18 = vector.broadcast %cst_11 : f32 to vector<8x128xf32>
    %19 = arith.addf %18, %17 : vector<8x128xf32>
    %20 = arith.divf %18, %19 : vector<8x128xf32>
    %c0_12 = arith.constant 0 : index
    %c0_13 = arith.constant 0 : index
    %21 = vector.load %arg6[%c0_12, %c0_13] : memref<1x8xf32, #tpu.memory_space<vmem>>, vector<1x8xf32>
    %cst_14 = arith.constant dense<0.000000e+00> : vector<1x128xf32>
    %22 = tpu.matmul %21, %20, %cst_14 {dimension_numbers = #tpu.dot_dimension_numbers<[1], [0], [0], [1], [0, 0, 1, 1], [], []>} : vector<1x8xf32>, vector<8x128xf32>, vector<1x128xf32> -> vector<1x128xf32>
    %c0_15 = arith.constant 0 : index
    %c0_16 = arith.constant 0 : index
    %23 = vector.load %arg7[%c0_15, %c0_16] : memref<1x1xf32, #tpu.memory_space<vmem>>, vector<1x1xf32>
    %24 = vector.broadcast %23 : vector<1x1xf32> to vector<1x128xf32>
    %25 = arith.addf %22, %24 : vector<1x128xf32>
    %26 = arith.negf %25 : vector<1x128xf32>
    %27 = math.exp %26 : vector<1x128xf32>
    %cst_17 = arith.constant 1.000000e+00 : f32
    %28 = vector.broadcast %cst_17 : f32 to vector<1x128xf32>
    %29 = arith.addf %28, %27 : vector<1x128xf32>
    %30 = arith.divf %28, %29 : vector<1x128xf32>
    %cst_18 = arith.constant 1.000000e+00 : f32
    %31 = vector.broadcast %cst_18 : f32 to vector<1x128xf32>
    %32 = arith.subf %31, %30 : vector<1x128xf32>
    %33 = tpu.concatenate %32, %30 in 0 : vector<1x128xf32>, vector<1x128xf32> -> vector<2x128xf32>
    %c0_19 = arith.constant 0 : index
    %c0_20 = arith.constant 0 : index
    %34 = vector.load %arg8[%c0_19, %c0_20] : memref<2x128xf32, #tpu.memory_space<vmem>>, vector<2x128xf32>
    tpu.vector_store %arg8[%c0_19, %c0_20], %33 {strides = array<i32>} : memref<2x128xf32, #tpu.memory_space<vmem>>, vector<2x128xf32>,
    return
  }
  func.func @transform_0(%arg0: i32) -> (i32, i32) {
    %c0_i32 = arith.constant 0 : i32
    %c0_i32_0 = arith.constant 0 : i32
    return %c0_i32, %arg0 : i32, i32
  }
  func.func @transform_1(%arg0: i32) -> (i32, i32) {
    %c0_i32 = arith.constant 0 : i32
    %c0_i32_0 = arith.constant 0 : i32
    %c0_i32_1 = arith.constant 0 : i32
    return %c0_i32, %c0_i32_0 : i32, i32
  }
  func.func @transform_2(%arg0: i32) -> (i32, i32) {
    %c0_i32 = arith.constant 0 : i32
    %c0_i32_0 = arith.constant 0 : i32
    %c0_i32_1 = arith.constant 0 : i32
    return %c0_i32, %c0_i32_0 : i32, i32
  }
  func.func @transform_3(%arg0: i32) -> (i32, i32) {
    %c0_i32 = arith.constant 0 : i32
    %c0_i32_0 = arith.constant 0 : i32
    %c0_i32_1 = arith.constant 0 : i32
    return %c0_i32, %c0_i32_0 : i32, i32
  }
  func.func @transform_4(%arg0: i32) -> (i32, i32) {
    %c0_i32 = arith.constant 0 : i32
    %c0_i32_0 = arith.constant 0 : i32
    %c0_i32_1 = arith.constant 0 : i32
    return %c0_i32, %c0_i32_0 : i32, i32
  }
  func.func @transform_5(%arg0: i32) -> (i32, i32) {
    %c0_i32 = arith.constant 0 : i32
    %c0_i32_0 = arith.constant 0 : i32
    %c0_i32_1 = arith.constant 0 : i32
    return %c0_i32, %c0_i32_0 : i32, i32
  }
  func.func @transform_6(%arg0: i32) -> (i32, i32) {
    %c0_i32 = arith.constant 0 : i32
    %c0_i32_0 = arith.constant 0 : i32
    %c0_i32_1 = arith.constant 0 : i32
    return %c0_i32, %c0_i32_0 : i32, i32
  }
  func.func @transform_7(%arg0: i32) -> (i32, i32) {
    %c0_i32 = arith.constant 0 : i32
    %c0_i32_0 = arith.constant 0 : i32
    return %c0_i32, %arg0 : i32, i32
  }
}

</mosaic_0001>

<llo_original>
// kernel: titanic_mlp_forward.1
$region0: #{titanic_mlp_forward.1}
  #allocation0 [shape = 'u32[]', space=smem, size = 0x4, offset = 0x4, fixed_abs, tag = 'smem constant byte address 0x4 - core index']
  #allocation1 [shape = 'u32[144,128]{1,0:T(1,128)}', space=vmem, size = 0x12000, scoped, tag = 'internal scratch']
  #allocation2 [shape = 'f32[1,1]{1,0:T(1,128)S(1)}', space=vmem, size = 0x200, scoped, tag = 'scoped memory for titanic_mlp_forward.1']
  %s0 = inlined_call_operand.vmem [shape: f32[12,128], index: 0, kind: input, shape index: {}]
  %s1 = inlined_call_operand.vmem [shape: f32[12,12], index: 1, kind: input, shape index: {}]
  %s2 = inlined_call_operand.vmem [shape: f32[12,1], index: 2, kind: input, shape index: {}]
  %s3 = inlined_call_operand.vmem [shape: f32[8,12], index: 3, kind: input, shape index: {}]
  %s4 = inlined_call_operand.vmem [shape: f32[8,1], index: 4, kind: input, shape index: {}]
  %s5 = inlined_call_operand.vmem [shape: f32[1,8], index: 5, kind: input, shape index: {}]
  %s6 = inlined_call_operand.<no memory space> [shape: f32[1,1], index: 6, kind: input, shape index: {}]
  %s7 = inlined_call_operand.vmem [shape: f32[2,128], index: 7, kind: output, shape index: {}]
  %s8 = sld [smem:[#allocation0]]
  $region38: #{titanic_mlp_forward.1} parent=0
    _
  %s10 = ssub.s32 1, %s8
  %s11 = scalar_select 0, %s10, %s8
  %v12 = vstv %s6
  %13 = vst [vmem:[#allocation2] sm:$0x1] %v12
  // Predicated region
  $region2: #{titanic_mlp_forward.1} parent=0 // pred_check
    _
  $region3: #{titanic_mlp_forward.1} parent=0 // pred_check_branch
    %15 = sbr.rel (0) target = $region5
  $region4: #{titanic_mlp_forward.1} parent=0 // pred_region
    _
  $region5: #{titanic_mlp_forward.1} parent=0 // pred_fallthru
    _
  // Predicated region
  $region6: #{titanic_mlp_forward.1} parent=0 // pred_check
    _
  $region7: #{titanic_mlp_forward.1} parent=0 // pred_check_branch
    %17 = sbr.rel (0) target = $region9
  $region8: #{titanic_mlp_forward.1} parent=0 // pred_region
    _
  $region9: #{titanic_mlp_forward.1} parent=0 // pred_fallthru
    _
  // Predicated region
  $region10: #{titanic_mlp_forward.1} parent=0 // pred_check
    _
  $region11: #{titanic_mlp_forward.1} parent=0 // pred_check_branch
    %19 = sbr.rel (0) target = $region13
  $region12: #{titanic_mlp_forward.1} parent=0 // pred_region
    _
  $region13: #{titanic_mlp_forward.1} parent=0 // pred_fallthru
    _
  // Predicated region
  $region14: #{titanic_mlp_forward.1} parent=0 // pred_check
    _
  $region15: #{titanic_mlp_forward.1} parent=0 // pred_check_branch
    %21 = sbr.rel (0) target = $region17
  $region16: #{titanic_mlp_forward.1} parent=0 // pred_region
    _
  $region17: #{titanic_mlp_forward.1} parent=0 // pred_fallthru
    _
  // Predicated region
  $region18: #{titanic_mlp_forward.1} parent=0 // pred_check
    _
  $region19: #{titanic_mlp_forward.1} parent=0 // pred_check_branch
    %23 = sbr.rel (0) target = $region21
  $region20: #{titanic_mlp_forward.1} parent=0 // pred_region
    _
  $region21: #{titanic_mlp_forward.1} parent=0 // pred_fallthru
    _
  // Predicated region
  $region22: #{titanic_mlp_forward.1} parent=0 // pred_check
    _
  $region23: #{titanic_mlp_forward.1} parent=0 // pred_check_branch
    %25 = sbr.rel (0) target = $region25
  $region24: #{titanic_mlp_forward.1} parent=0 // pred_region
    _
  $region25: #{titanic_mlp_forward.1} parent=0 // pred_fallthru
    _
  // Predicated region
  $region26: #{titanic_mlp_forward.1} parent=0 // pred_check
    _
  $region27: #{titanic_mlp_forward.1} parent=0 // pred_check_branch
    %27 = sbr.rel (0) target = $region29
  $region28: #{titanic_mlp_forward.1} parent=0 // pred_region
    _
  $region29: #{titanic_mlp_forward.1} parent=0 // pred_fallthru
    _
  %v28 = vld [vmem:[%s0] sm:$0xff]
  %v29 = vld [vmem:[%s0 + $0x8] sm:$0xf]
  %v30 = vld [vmem:[%s1] sm:$0xff]
  %v31 = vld [vmem:[%s1 + $0x8] sm:$0xf]
  %v32 = vld [vmem:[%s2] sm:$0xff]
  %v33 = vld [vmem:[%s2 + $0x8] sm:$0xf]
  %35 = vset.pattern.permute.xlu0 0
  %36 = vperm.xlu0 %35, %v32
  %v37 = vpop.permute.xlu0 %36
  %40 = vset.pattern.permute.xlu0 0
  %41 = vperm.xlu0 %40, %v33
  %v42 = vpop.permute.xlu0 %41
  %vm44 = vcmask 97280
  %v46 = vsel %vm44, %v30, 0
  %v49 = vsel %vm44, %v31, 0
  %vm51 = vcmask 1043456
  %v53 = vsel %vm51, %v29, 0
  %55 = vmatprep.subr.mxu0 0.0
  %56 = vmatpush1.msra.mxu0 0.0
  %57 = vmatprep.subr.mxu0 0.0
  %58 = vmatpush1.msra.mxu0 0.0
  %59 = vmatprep.subr.mxu0 0.0
  %60 = vmatpush1.msra.mxu0 0.0
  %61 = vmatprep.subr.mxu0 0.0
  %62 = vmatpush1.msra.mxu0 0.0
  %63 = vmatprep.subr.mxu0 0.0
  %64 = vmatpush1.msra.mxu0 0.0
  %65 = vmatprep.subr.mxu0 0.0
  %66 = vmatpush1.msra.mxu0 0.0
  %67 = vmatprep.subr.mxu0 0.0
  %68 = vmatpush1.msra.mxu0 0.0
  %69 = vmatprep.subr.mxu0 0.0
  %70 = vmatpush1.msra.mxu0 0.0
  %71 = vmatprep.subr.mxu0 0.0
  %72 = vmatpush1.msra.mxu0 0.0
  %73 = vmatprep.subr.mxu0 0.0
  %74 = vmatpush1.msra.mxu0 0.0
  %75 = vmatprep.subr.mxu0 0.0
  %76 = vmatpush1.msra.mxu0 0.0
  %77 = vmatprep.subr.mxu0 0.0
  %78 = vmatpush1.msra.mxu0 0.0
  %79 = vmatprep.subr.mxu0 0.0
  %80 = vmatpush1.msra.mxu0 0.0
  %81 = vmatprep.subr.mxu0 0.0
  %82 = vmatpush1.msra.mxu0 0.0
  %83 = vmatprep.subr.mxu0 0.0
  %84 = vmatpush1.msra.mxu0 %v53
  %85 = vmatprep.subr.mxu0 0.0
  %86 = vmatpush1.msra.mxu0 %v28
  %87 = vmatprep.subr.mxu0 0.0
  %88 = vmatpush2.msra.mxu0 0.0
  %89 = vmatprep.subr.mxu0 0.0
  %90 = vmatpush2.msra.mxu0 0.0
  %91 = vmatprep.subr.mxu0 0.0
  %92 = vmatpush2.msra.mxu0 0.0
  %93 = vmatprep.subr.mxu0 0.0
  %94 = vmatpush2.msra.mxu0 0.0
  %95 = vmatprep.subr.mxu0 0.0
  %96 = vmatpush2.msra.mxu0 0.0
  %97 = vmatprep.subr.mxu0 0.0
  %98 = vmatpush2.msra.mxu0 0.0
  %99 = vmatprep.subr.mxu0 0.0
  %100 = vmatpush2.msra.mxu0 0.0
  %101 = vmatprep.subr.mxu0 0.0
  %102 = vmatpush2.msra.mxu0 0.0
  %103 = vmatprep.subr.mxu0 0.0
  %104 = vmatpush2.msra.mxu0 0.0
  %105 = vmatprep.subr.mxu0 0.0
  %106 = vmatpush2.msra.mxu0 0.0
  %107 = vmatprep.subr.mxu0 0.0
  %108 = vmatpush2.msra.mxu0 0.0
  %109 = vmatprep.subr.mxu0 0.0
  %110 = vmatpush2.msra.mxu0 0.0
  %111 = vmatprep.subr.mxu0 0.0
  %112 = vmatpush2.msra.mxu0 0.0
  %113 = vmatprep.subr.mxu0 0.0
  %114 = vmatpush2.msra.mxu0 0.0
  %115 = vmatprep.subr.mxu0 0.0
  %116 = vmatpush2.msra.mxu0 0.0
  %117 = vmatprep.subr.mxu0 0.0
  %118 = vmatpush2.msra.mxu0 0.0
  %119 = vmatprep.mubr.f32.mxu0 0.0
  %120 = vmatmul.mubr.f32.gmra.mxu0 %v46
  %v121 = vpop.f32.mrf.mxu0
  %v122 = vadd.f32 %v37, %v121
  %v123 = vpop.f32.mrf.mxu0
  %124 = vmatprep.mubr.f32.mxu0 0.0
  %125 = vmatmul.mubr.f32.gmra.mxu0 %v49
  %v126 = vpop.f32.mrf.mxu0
  %v127 = vadd.f32 %v42, %v126
  %v128 = vpop.f32.mrf.mxu0
  %129 = vdwg.mxu0
  %v130 = vxor.u32 %v122, 2147483648
  %v131 = vxor.u32 %v127, 2147483648
  %v132 = vmul.f32 %v130, 1.442695
  %v133 = vpow.pop %v132
  %v134 = vmul.f32 %v131, 1.442695
  %v135 = vpow.pop %v134
  %v136 = vadd.f32 %v133, 1.0
  %v137 = vadd.f32 %v135, 1.0
  %v138 = vrcp.pop %v136
  %v139 = vmul.f32 1.0, %v138
  %v140 = vrcp.pop %v137
  %v141 = vmul.f32 1.0, %v140
  %v142 = vld [vmem:[%s3] sm:$0xff]
  %v143 = vld [vmem:[%s4] sm:$0xff]
  %145 = vset.pattern.permute.xlu0 0
  %146 = vperm.xlu0 %145, %v143
  %v147 = vpop.permute.xlu0 %146
  %v150 = vsel %vm44, %v142, 0
  %v153 = vsel %vm51, %v141, 0
  %155 = vmatprep.subr.mxu0 0.0
  %156 = vmatpush1.msra.mxu0 0.0
  %157 = vmatprep.subr.mxu0 0.0
  %158 = vmatpush1.msra.mxu0 0.0
  %159 = vmatprep.subr.mxu0 0.0
  %160 = vmatpush1.msra.mxu0 0.0
  %161 = vmatprep.subr.mxu0 0.0
  %162 = vmatpush1.msra.mxu0 0.0
  %163 = vmatprep.subr.mxu0 0.0
  %164 = vmatpush1.msra.mxu0 0.0
  %165 = vmatprep.subr.mxu0 0.0
  %166 = vmatpush1.msra.mxu0 0.0
  %167 = vmatprep.subr.mxu0 0.0
  %168 = vmatpush1.msra.mxu0 0.0
  %169 = vmatprep.subr.mxu0 0.0
  %170 = vmatpush1.msra.mxu0 0.0
  %171 = vmatprep.subr.mxu0 0.0
  %172 = vmatpush1.msra.mxu0 0.0
  %173 = vmatprep.subr.mxu0 0.0
  %174 = vmatpush1.msra.mxu0 0.0
  %175 = vmatprep.subr.mxu0 0.0
  %176 = vmatpush1.msra.mxu0 0.0
  %177 = vmatprep.subr.mxu0 0.0
  %178 = vmatpush1.msra.mxu0 0.0
  %179 = vmatprep.subr.mxu0 0.0
  %180 = vmatpush1.msra.mxu0 0.0
  %181 = vmatprep.subr.mxu0 0.0
  %182 = vmatpush1.msra.mxu0 0.0
  %183 = vmatprep.subr.mxu0 0.0
  %184 = vmatpush1.msra.mxu0 %v153
  %185 = vmatprep.subr.mxu0 0.0
  %186 = vmatpush1.msra.mxu0 %v139
  %187 = vmatprep.subr.mxu0 0.0
  %188 = vmatpush2.msra.mxu0 0.0
  %189 = vmatprep.subr.mxu0 0.0
  %190 = vmatpush2.msra.mxu0 0.0
  %191 = vmatprep.subr.mxu0 0.0
  %192 = vmatpush2.msra.mxu0 0.0
  %193 = vmatprep.subr.mxu0 0.0
  %194 = vmatpush2.msra.mxu0 0.0
  %195 = vmatprep.subr.mxu0 0.0
  %196 = vmatpush2.msra.mxu0 0.0
  %197 = vmatprep.subr.mxu0 0.0
  %198 = vmatpush2.msra.mxu0 0.0
  %199 = vmatprep.subr.mxu0 0.0
  %200 = vmatpush2.msra.mxu0 0.0
  %201 = vmatprep.subr.mxu0 0.0
  %202 = vmatpush2.msra.mxu0 0.0
  %203 = vmatprep.subr.mxu0 0.0
  %204 = vmatpush2.msra.mxu0 0.0
  %205 = vmatprep.subr.mxu0 0.0
  %206 = vmatpush2.msra.mxu0 0.0
  %207 = vmatprep.subr.mxu0 0.0
  %208 = vmatpush2.msra.mxu0 0.0
  %209 = vmatprep.subr.mxu0 0.0
  %210 = vmatpush2.msra.mxu0 0.0
  %211 = vmatprep.subr.mxu0 0.0
  %212 = vmatpush2.msra.mxu0 0.0
  %213 = vmatprep.subr.mxu0 0.0
  %214 = vmatpush2.msra.mxu0 0.0
  %215 = vmatprep.subr.mxu0 0.0
  %216 = vmatpush2.msra.mxu0 0.0
  %217 = vmatprep.subr.mxu0 0.0
  %218 = vmatpush2.msra.mxu0 0.0
  %219 = vmatprep.mubr.f32.mxu0 0.0
  %220 = vmatmul.mubr.f32.gmra.mxu0 %v150
  %v221 = vpop.f32.mrf.mxu0
  %v222 = vadd.f32 %v147, %v221
  %v223 = vpop.f32.mrf.mxu0
  %224 = vdwg.mxu0
  %v225 = vxor.u32 %v222, 2147483648
  %v226 = vmul.f32 %v225, 1.442695
  %v227 = vpow.pop %v226
  %v228 = vadd.f32 %v227, 1.0
  %v229 = vrcp.pop %v228
  %v230 = vmul.f32 1.0, %v229
  %v231 = vld [vmem:[%s5] sm:$0x1]
  %v232 = vld [vmem:[#allocation2] sm:$0x1]
  %234 = vset.pattern.permute.xlu0 0
  %235 = vperm.xlu0 %234, %v232
  %v236 = vpop.permute.xlu0 %235
  %v238 = vlaneseq
  %v239 = vshrl.u32 %v238, 7
  %v240 = vsub.s32 0, %v239
  %v241 = vrot.slane %v236, %v240
  %vm242 = vcmask 64512
  %v244 = vsel %vm242, %v231, 0
  %246 = vmatprep.subr.mxu0 0.0
  %247 = vmatpush1.msra.mxu0 0.0
  %248 = vmatprep.subr.mxu0 0.0
  %249 = vmatpush1.msra.mxu0 0.0
  %250 = vmatprep.subr.mxu0 0.0
  %251 = vmatpush1.msra.mxu0 0.0
  %252 = vmatprep.subr.mxu0 0.0
  %253 = vmatpush1.msra.mxu0 0.0
  %254 = vmatprep.subr.mxu0 0.0
  %255 = vmatpush1.msra.mxu0 0.0
  %256 = vmatprep.subr.mxu0 0.0
  %257 = vmatpush1.msra.mxu0 0.0
  %258 = vmatprep.subr.mxu0 0.0
  %259 = vmatpush1.msra.mxu0 0.0
  %260 = vmatprep.subr.mxu0 0.0
  %261 = vmatpush1.msra.mxu0 0.0
  %262 = vmatprep.subr.mxu0 0.0
  %263 = vmatpush1.msra.mxu0 0.0
  %264 = vmatprep.subr.mxu0 0.0
  %265 = vmatpush1.msra.mxu0 0.0
  %266 = vmatprep.subr.mxu0 0.0
  %267 = vmatpush1.msra.mxu0 0.0
  %268 = vmatprep.subr.mxu0 0.0
  %269 = vmatpush1.msra.mxu0 0.0
  %270 = vmatprep.subr.mxu0 0.0
  %271 = vmatpush1.msra.mxu0 0.0
  %272 = vmatprep.subr.mxu0 0.0
  %273 = vmatpush1.msra.mxu0 0.0
  %274 = vmatprep.subr.mxu0 0.0
  %275 = vmatpush1.msra.mxu0 0.0
  %276 = vmatprep.subr.mxu0 0.0
  %277 = vmatpush1.msra.mxu0 %v230
  %278 = vmatprep.subr.mxu0 0.0
  %279 = vmatpush2.msra.mxu0 0.0
  %280 = vmatprep.subr.mxu0 0.0
  %281 = vmatpush2.msra.mxu0 0.0
  %282 = vmatprep.subr.mxu0 0.0
  %283 = vmatpush2.msra.mxu0 0.0
  %284 = vmatprep.subr.mxu0 0.0
  %285 = vmatpush2.msra.mxu0 0.0
  %286 = vmatprep.subr.mxu0 0.0
  %287 = vmatpush2.msra.mxu0 0.0
  %288 = vmatprep.subr.mxu0 0.0
  %289 = vmatpush2.msra.mxu0 0.0
  %290 = vmatprep.subr.mxu0 0.0
  %291 = vmatpush2.msra.mxu0 0.0
  %292 = vmatprep.subr.mxu0 0.0
  %293 = vmatpush2.msra.mxu0 0.0
  %294 = vmatprep.subr.mxu0 0.0
  %295 = vmatpush2.msra.mxu0 0.0
  %296 = vmatprep.subr.mxu0 0.0
  %297 = vmatpush2.msra.mxu0 0.0
  %298 = vmatprep.subr.mxu0 0.0
  %299 = vmatpush2.msra.mxu0 0.0
  %300 = vmatprep.subr.mxu0 0.0
  %301 = vmatpush2.msra.mxu0 0.0
  %302 = vmatprep.subr.mxu0 0.0
  %303 = vmatpush2.msra.mxu0 0.0
  %304 = vmatprep.subr.mxu0 0.0
  %305 = vmatpush2.msra.mxu0 0.0
  %306 = vmatprep.subr.mxu0 0.0
  %307 = vmatpush2.msra.mxu0 0.0
  %308 = vmatprep.subr.mxu0 0.0
  %309 = vmatpush2.msra.mxu0 0.0
  %310 = vmatprep.mubr.f32.mxu0 0.0
  %311 = vmatmul.mubr.f32.gmra.mxu0 %v244
  %v312 = vpop.f32.mrf.mxu0
  %v313 = vadd.f32 %v241, %v312
  %v314 = vpop.f32.mrf.mxu0
  %315 = vdwg.mxu0
  %v316 = vxor.u32 %v313, 2147483648
  %v317 = vmul.f32 %v316, 1.442695
  %v318 = vpow.pop %v317
  %v319 = vadd.f32 %v318, 1.0
  %v320 = vrcp.pop %v319
  %v321 = vmul.f32 1.0, %v320
  %v322 = vsub.f32 1.0, %v321
  %v324 = vrot.slane %v321, 7
  %vm326 = vcmask 1040384
  %v327 = vsel %vm326, %v322, %v324
  %328 = vst [vmem:[%s7] sm:$0x3] %v327
  // Predicated region
  $region30: #{titanic_mlp_forward.1} parent=0 // pred_check
    _
  $region31: #{titanic_mlp_forward.1} parent=0 // pred_check_branch
    %330 = sbr.rel (0) target = $region33
  $region32: #{titanic_mlp_forward.1} parent=0 // pred_region
    _
  $region33: #{titanic_mlp_forward.1} parent=0 // pred_fallthru
    _
  // Predicated region
  $region34: #{titanic_mlp_forward.1} parent=0 // pred_check
    _
  $region35: #{titanic_mlp_forward.1} parent=0 // pred_check_branch
    %332 = sbr.rel (0) target = $region37
  $region36: #{titanic_mlp_forward.1} parent=0 // pred_region
    _
  $region37: #{titanic_mlp_forward.1} parent=0 // pred_fallthru
    _

</llo_original>
